<compile_context>
chip_gen: v7x
topology: tpu7x:2x2x1
jax: 0.10.0
libtpu: 0.0.40
codegen_flags: <defaults>
</compile_context>

<pallas_src>
import jax
import jax.numpy as jnp
from jax.experimental import pallas as pl
from jax.experimental.pallas import tpu as pltpu

H = 32  # hidden width of the PINN MLP


def mlp_kernel(x_ref, p_ref, o_ref):
    # x_ref : (2, TM)        batch on lanes
    # p_ref : (5, H, H+1)    packed params; [l,:,0:H]=W_l (out,in), [l,:,H]=b_l
    #                        layer 4 stores W4^T in column 0 and b4 at [4,0,H]
    # o_ref : (1, TM)        lane-dense output
    x = x_ref[...]                                     # (2, TM)
    p = p_ref[...]                                     # (5, H, H+1), resident

    # Layer 0: K=2 contraction as two broadcast multiply-adds on the VPU.
    w0 = p[0, :, 0:2]                                  # (H, 2)
    b0 = p[0, :, H:H + 1]                              # (H, 1)
    h = jnp.tanh(w0[:, 0:1] * x[0:1, :] + w0[:, 1:2] * x[1:2, :] + b0)

    # Layers 1-3: 32x32 MXU matmuls; batch stays on the lane axis.
    for l in range(1, 4):
        w = p[l, :, 0:H]                               # (H, H)
        b = p[l, :, H:H + 1]                           # (H, 1)
        h = jnp.tanh(jnp.dot(w, h, preferred_element_type=jnp.float32) + b)

    # Output layer: avoid an M=1 MXU matmul; do a VPU multiply by W4^T
    # (broadcast over lanes) and a cross-sublane sum on the XLU.
    w4 = p[4, :, 0:1]                                  # (H, 1) == W4^T
    b4 = p[4, 0:1, H:H + 1]                            # (1, 1)
    y = jnp.sum(w4 * h, axis=0, keepdims=True) + b4    # (1, TM)
    o_ref[...] = y.astype(o_ref.dtype)                 # lane-dense store


def _cdiv(a, b):
    return -(-a // b)


def _round_up(n, m):
    return _cdiv(n, m) * m


def _choose_tile(n, max_tile):
    """Balance padding against per-step overhead; force >=2 steps when the
    batch can be split so a v7x megacore keeps both TensorCores busy."""
    n_steps = _cdiv(n, max_tile)
    if n_steps == 1 and n > 128:
        n_steps = 2
    return _round_up(_cdiv(n, n_steps), 128)


def pack_params(params):
    """Pack the 5 (W, b) pairs (PyTorch (out, in) layout) into one f32 slab."""
    slab = jnp.zeros((5, H, H + 1), jnp.float32)
    w0, b0 = params[0]                                  # (32, 2), (32,)
    slab = slab.at[0, :, 0:2].set(w0.astype(jnp.float32))
    slab = slab.at[0, :, H].set(b0.astype(jnp.float32))
    for l in range(1, 4):
        w, b = params[l]                                # (32, 32), (32,)
        slab = slab.at[l, :, 0:H].set(w.astype(jnp.float32))
        slab = slab.at[l, :, H].set(b.astype(jnp.float32))
    w4, b4 = params[4]                                  # (1, 32), (1,)
    slab = slab.at[4, :, 0].set(w4[0].astype(jnp.float32))   # W4^T in column 0
    slab = slab.at[4, 0, H].set(b4[0].astype(jnp.float32))
    return slab


def mlp_forward_fm(x_fm, param_slab, *, max_tile=2048):
    """Feature-major entry point: x_fm (2, N) -> (1, N).

    Use this end-to-end in a PINN residual loop to avoid the per-call
    transpose/pad HBM traffic of the (N, 2) wrapper below.
    """
    n = x_fm.shape[1]
    tm = _choose_tile(n, max_tile)
    n_pad = _cdiv(n, tm) * tm
    if n_pad != n:
        x_fm = jnp.pad(x_fm, ((0, 0), (0, n_pad - n)))

    out_fm = pl.pallas_call(
        mlp_kernel,
        out_shape=jax.ShapeDtypeStruct((1, n_pad), jnp.float32),
        grid_spec=pltpu.PrefetchScalarGridSpec(
            num_scalar_prefetch=0,
            grid=(n_pad // tm,),
            in_specs=[
                pl.BlockSpec((2, tm), lambda i: (0, i)),          # x, batch on lanes
                pl.BlockSpec((5, H, H + 1), lambda i: (0, 0, 0)),  # params, resident
            ],
            out_specs=pl.BlockSpec((1, tm), lambda i: (0, i)),
        ),
        compiler_params=pltpu.CompilerParams(
            dimension_semantics=("parallel",)),
    )(x_fm.astype(jnp.float32), param_slab)

    return out_fm[:, :n]


def mlp_forward(x, params, *, max_tile=2048):
    """PyTorch-compatible interface: x (N, 2) -> (N, 1)."""
    slab = pack_params(params)
    out_fm = mlp_forward_fm(x.T, slab, max_tile=max_tile)    # (1, N)
    return out_fm.T                                           # (N, 1)


def init_params(key):
    """Deterministic init mimicking torch.nn.Linear (U(-1/sqrt(fan_in), +...)).
    Weights stored PyTorch-style as (out_features, in_features)."""
    dims = [(2, 32), (32, 32), (32, 32), (32, 32), (32, 1)]
    params = []
    for (fan_in, fan_out) in dims:
        key, kw, kb = jax.random.split(key, 3)
        bound = 1.0 / (fan_in ** 0.5)
        w = jax.random.uniform(kw, (fan_out, fan_in), jnp.float32, -bound, bound)
        b = jax.random.uniform(kb, (fan_out,), jnp.float32, -bound, bound)
        params.append((w, b))
    return params


def mlp_reference(x, params):
    h = x
    for i, (w, b) in enumerate(params):
        h = h @ w.T + b
        if i < len(params) - 1:
            h = jnp.tanh(h)
    return h


if __name__ == "__main__":
    key = jax.random.PRNGKey(0)
    kx, kp = jax.random.split(key)

    N = 256                                   # batch of 2-D collocation points
    x = jax.random.uniform(kx, (N, 2), jnp.float32, -1.0, 1.0)
    params = init_params(kp)

    out = mlp_forward(x, params)              # grid=(2,) of 128-wide tiles
    out = jax.block_until_ready(out)

    ref = mlp_reference(x, params)
    assert out.shape == (N, 1)
    assert jnp.allclose(out, ref, atol=1e-5, rtol=1e-5), "mismatch vs reference"

    print("KERNEL_OK")
</pallas_src>

<mosaic_0001>
module attributes {stable_mosaic.version = 11 : i64} {
  func.func @mlp_kernel(%arg0: i32, %arg1: memref<2x128xf32, #tpu.memory_space<vmem>>, %arg2: memref<5x32x33xf32, #tpu.memory_space<vmem>>, %arg3: memref<1x128xf32, #tpu.memory_space<vmem>>) attributes {dimension_semantics = [#tpu.dimension_semantics<parallel>], iteration_bounds = array<i64: 2>, scalar_prefetch = 0 : i64, scratch_operands = 0 : i64, tpu.core_type = #tpu.core_type<tc>, window_params = [{transform_indices = @transform_0, window_bounds = array<i64: 2, 128>}, {pipeline_mode = #tpu.pipeline_mode<synchronous>, transform_indices = @transform_1, window_bounds = array<i64: 5, 32, 33>}, {transform_indices = @transform_2, window_bounds = array<i64: 1, 128>}]} {
    %c0 = arith.constant 0 : index
    %c0_0 = arith.constant 0 : index
    %0 = vector.load %arg1[%c0, %c0_0] : memref<2x128xf32, #tpu.memory_space<vmem>>, vector<2x128xf32>
    %c0_1 = arith.constant 0 : index
    %c0_2 = arith.constant 0 : index
    %c0_3 = arith.constant 0 : index
    %1 = vector.load %arg2[%c0_1, %c0_2, %c0_3] : memref<5x32x33xf32, #tpu.memory_space<vmem>>, vector<5x32x33xf32>
    %2 = vector.extract_strided_slice %1 {offsets = [0, 0, 0], sizes = [1, 32, 2], strides = [1, 1, 1]} : vector<5x32x33xf32> to vector<1x32x2xf32>
    %3 = vector.shape_cast %2 : vector<1x32x2xf32> to vector<32x2xf32>
    %4 = vector.extract_strided_slice %1 {offsets = [0, 0, 32], sizes = [1, 32, 1], strides = [1, 1, 1]} : vector<5x32x33xf32> to vector<1x32x1xf32>
    %5 = vector.shape_cast %4 : vector<1x32x1xf32> to vector<32x1xf32>
    %6 = vector.extract_strided_slice %3 {offsets = [0, 0], sizes = [32, 1], strides = [1, 1]} : vector<32x2xf32> to vector<32x1xf32>
    %7 = vector.extract_strided_slice %0 {offsets = [0, 0], sizes = [1, 128], strides = [1, 1]} : vector<2x128xf32> to vector<1x128xf32>
    %8 = vector.broadcast %6 : vector<32x1xf32> to vector<32x128xf32>
    %9 = vector.broadcast %7 : vector<1x128xf32> to vector<32x128xf32>
    %10 = arith.mulf %8, %9 : vector<32x128xf32>
    %11 = vector.extract_strided_slice %3 {offsets = [0, 1], sizes = [32, 1], strides = [1, 1]} : vector<32x2xf32> to vector<32x1xf32>
    %12 = vector.extract_strided_slice %0 {offsets = [1, 0], sizes = [1, 128], strides = [1, 1]} : vector<2x128xf32> to vector<1x128xf32>
    %13 = vector.broadcast %11 : vector<32x1xf32> to vector<32x128xf32>
    %14 = vector.broadcast %12 : vector<1x128xf32> to vector<32x128xf32>
    %15 = arith.mulf %13, %14 : vector<32x128xf32>
    %16 = arith.addf %10, %15 : vector<32x128xf32>
    %17 = vector.broadcast %5 : vector<32x1xf32> to vector<32x128xf32>
    %18 = arith.addf %16, %17 : vector<32x128xf32>
    %19 = math.tanh %18 : vector<32x128xf32>
    %20 = vector.extract_strided_slice %1 {offsets = [1, 0, 0], sizes = [1, 32, 32], strides = [1, 1, 1]} : vector<5x32x33xf32> to vector<1x32x32xf32>
    %21 = vector.shape_cast %20 : vector<1x32x32xf32> to vector<32x32xf32>
    %22 = vector.extract_strided_slice %1 {offsets = [1, 0, 32], sizes = [1, 32, 1], strides = [1, 1, 1]} : vector<5x32x33xf32> to vector<1x32x1xf32>
    %23 = vector.shape_cast %22 : vector<1x32x1xf32> to vector<32x1xf32>
    %cst = arith.constant dense<0.000000e+00> : vector<32x128xf32>
    %24 = tpu.matmul %21, %19, %cst {dimension_numbers = #tpu.dot_dimension_numbers<[1], [0], [0], [1], [0, 0, 1, 1], [], []>} : vector<32x32xf32>, vector<32x128xf32>, vector<32x128xf32> -> vector<32x128xf32>
    %25 = vector.broadcast %23 : vector<32x1xf32> to vector<32x128xf32>
    %26 = arith.addf %24, %25 : vector<32x128xf32>
    %27 = math.tanh %26 : vector<32x128xf32>
    %28 = vector.extract_strided_slice %1 {offsets = [2, 0, 0], sizes = [1, 32, 32], strides = [1, 1, 1]} : vector<5x32x33xf32> to vector<1x32x32xf32>
    %29 = vector.shape_cast %28 : vector<1x32x32xf32> to vector<32x32xf32>
    %30 = vector.extract_strided_slice %1 {offsets = [2, 0, 32], sizes = [1, 32, 1], strides = [1, 1, 1]} : vector<5x32x33xf32> to vector<1x32x1xf32>
    %31 = vector.shape_cast %30 : vector<1x32x1xf32> to vector<32x1xf32>
    %cst_4 = arith.constant dense<0.000000e+00> : vector<32x128xf32>
    %32 = tpu.matmul %29, %27, %cst_4 {dimension_numbers = #tpu.dot_dimension_numbers<[1], [0], [0], [1], [0, 0, 1, 1], [], []>} : vector<32x32xf32>, vector<32x128xf32>, vector<32x128xf32> -> vector<32x128xf32>
    %33 = vector.broadcast %31 : vector<32x1xf32> to vector<32x128xf32>
    %34 = arith.addf %32, %33 : vector<32x128xf32>
    %35 = math.tanh %34 : vector<32x128xf32>
    %36 = vector.extract_strided_slice %1 {offsets = [3, 0, 0], sizes = [1, 32, 32], strides = [1, 1, 1]} : vector<5x32x33xf32> to vector<1x32x32xf32>
    %37 = vector.shape_cast %36 : vector<1x32x32xf32> to vector<32x32xf32>
    %38 = vector.extract_strided_slice %1 {offsets = [3, 0, 32], sizes = [1, 32, 1], strides = [1, 1, 1]} : vector<5x32x33xf32> to vector<1x32x1xf32>
    %39 = vector.shape_cast %38 : vector<1x32x1xf32> to vector<32x1xf32>
    %cst_5 = arith.constant dense<0.000000e+00> : vector<32x128xf32>
    %40 = tpu.matmul %37, %35, %cst_5 {dimension_numbers = #tpu.dot_dimension_numbers<[1], [0], [0], [1], [0, 0, 1, 1], [], []>} : vector<32x32xf32>, vector<32x128xf32>, vector<32x128xf32> -> vector<32x128xf32>
    %41 = vector.broadcast %39 : vector<32x1xf32> to vector<32x128xf32>
    %42 = arith.addf %40, %41 : vector<32x128xf32>
    %43 = math.tanh %42 : vector<32x128xf32>
    %44 = vector.extract_strided_slice %1 {offsets = [4, 0, 0], sizes = [1, 32, 1], strides = [1, 1, 1]} : vector<5x32x33xf32> to vector<1x32x1xf32>
    %45 = vector.shape_cast %44 : vector<1x32x1xf32> to vector<32x1xf32>
    %46 = vector.extract_strided_slice %1 {offsets = [4, 0, 32], sizes = [1, 1, 1], strides = [1, 1, 1]} : vector<5x32x33xf32> to vector<1x1x1xf32>
    %47 = vector.shape_cast %46 : vector<1x1x1xf32> to vector<1x1xf32>
    %48 = vector.broadcast %45 : vector<32x1xf32> to vector<32x128xf32>
    %49 = arith.mulf %48, %43 : vector<32x128xf32>
    %cst_6 = arith.constant dense<0.000000e+00> : vector<128xf32>
    %50 = vector.multi_reduction <add>, %49, %cst_6 [0] : vector<32x128xf32> to vector<128xf32>
    %51 = vector.shape_cast %50 : vector<128xf32> to vector<1x128xf32>
    %52 = vector.broadcast %47 : vector<1x1xf32> to vector<1x128xf32>
    %53 = arith.addf %51, %52 : vector<1x128xf32>
    %c0_7 = arith.constant 0 : index
    %c0_8 = arith.constant 0 : index
    %54 = vector.load %arg3[%c0_7, %c0_8] : memref<1x128xf32, #tpu.memory_space<vmem>>, vector<1x128xf32>
    tpu.vector_store %arg3[%c0_7, %c0_8], %53 {strides = array<i32>} : memref<1x128xf32, #tpu.memory_space<vmem>>, vector<1x128xf32>,
    return
  }
  func.func @transform_0(%arg0: i32) -> (i32, i32) {
    %c0_i32 = arith.constant 0 : i32
    %c0_i32_0 = arith.constant 0 : i32
    return %c0_i32, %arg0 : i32, i32
  }
  func.func @transform_1(%arg0: i32) -> (i32, i32, i32) {
    %c0_i32 = arith.constant 0 : i32
    %c0_i32_0 = arith.constant 0 : i32
    %c0_i32_1 = arith.constant 0 : i32
    %c0_i32_2 = arith.constant 0 : i32
    return %c0_i32, %c0_i32_0, %c0_i32_1 : i32, i32, i32
  }
  func.func @transform_2(%arg0: i32) -> (i32, i32) {
    %c0_i32 = arith.constant 0 : i32
    %c0_i32_0 = arith.constant 0 : i32
    return %c0_i32, %arg0 : i32, i32
  }
}

</mosaic_0001>

<llo_original>
// kernel: tpu_custom_call.1
$region0: #{tpu_custom_call.1}
  #allocation0 [shape = 'u32[]', space=smem, size = 0x4, offset = 0x4, fixed_abs, tag = 'smem constant byte address 0x4 - core index']
  #allocation1 [shape = 'u32[144,128]{1,0:T(1,128)}', space=vmem, size = 0x12000, scoped, tag = 'internal scratch']
  %s0 = inlined_call_operand.hbm [shape: f32[2,256], index: 0, kind: input, shape index: {}]
  %s1 = inlined_call_operand.hbm [shape: f32[5,32,33], index: 1, kind: input, shape index: {}]
  %s2 = inlined_call_operand.hbm [shape: f32[1,256], index: 2, kind: output, shape index: {}]
  %s3 = sld [smem:[#allocation0]]
  $region49: #{tpu_custom_call.1} parent=0
    _
  %s5 = ssub.s32 1, %s3
  %s6 = scalar_select 0, %s5, %s3
  $region1: #{tpu_custom_call.1} parent=0
    #allocation2 [shape = 'u8[2048]{0}', space=vmem, size = 0x800, scoped, tag = 'input window, operand 0']
    #allocation3 [shape = 's32[2]{0}', space=sflag, size = 0x8, scoped, tag = 'scoped memory for tpu_custom_call.1']
    #allocation4 [shape = 's32[2]{0}', space=sflag, size = 0x8, scoped, tag = 'scoped memory for tpu_custom_call.1']
    #allocation5 [shape = 'u8[81920]{0}', space=vmem, size = 0x14000, scoped, tag = 'input window, operand 1, single buffered']
    #allocation6 [shape = 's32[1]{0}', space=sflag, size = 0x4, scoped, tag = 'scoped memory for tpu_custom_call.1']
    #allocation7 [shape = 'u8[1024]{0}', space=vmem, size = 0x400, scoped, tag = 'output window, operand 0']
    %7 = vsyncpa [#allocation3], 0
    %s8 = scalar_lea.sflag [#allocation3], 1
    %9 = vsyncpa %s8, 0
    %10 = vsyncpa [#allocation6], 0
    %11 = vsyncpa [#allocation4], 0
    %s12 = scalar_lea.sflag [#allocation4], 1
    %13 = vsyncpa %s12, 0
    loop: start=0, step=1, limit=4
    $region2: #{tpu_custom_call.1} parent=1 // loop_pre_header
      _
    $region3: #{tpu_custom_call.1} parent=1 // loop_header
      %s15 = sphi 0, %s19
      %p16 = scmp.ge.s32.totalorder %s15, 4
      %s25 = sphi 0, %s27
      %s28 = sphi 0, %s25
      %s29 = sphi 0, %s28
      %s45 = sphi 0, %s29
      %s49 = sphi 0, %s49
      %s51 = sphi 0, %s49
      %s52 = sphi 0, %s51
      %s66 = sphi 0, %s52
      %s72 = sphi 0, %s74
      %s75 = sphi 0, %s72
      %s76 = sphi 0, %s75
      %s92 = sphi 0, %s76
    $region4: #{tpu_custom_call.1} parent=1 // loop_header_branch
      %18 = sbr.rel (%p16) target = $region8
    $region5: #{tpu_custom_call.1} parent=1 // loop_body
      %s20 = ssub.s32 %s15, 1
      %s21 = ssub.s32 %s15, 2
      %s22 = sadd.s32 %s15, 1
      %s23 = ssub.s32 %s15, %s22
      %p24 = scmp.eq.s32.totalorder %s23, 0
      %s26 = sadd.s32 %s25, 1
      %s27 = scalar_select %p24, %s25, %s26
      %p30 = pneg %p24
      %p31 = scmp.eq.s32.totalorder %s15, 1
      %p32 = por %p30, %p31
      %p33 = scmp.ne.s32.totalorder %s25, %s28
      %p34 = scmp.eq.s32.totalorder %s15, 0
      %p35 = por %p33, %p34
      %p36 = scmp.ne.s32.totalorder %s25, %s28
      %p37 = scmp.eq.s32.totalorder %s20, 1
      %p38 = por %p36, %p37
      %p39 = scmp.ne.s32.totalorder %s28, %s29
      %p40 = scmp.eq.s32.totalorder %s20, 0
      %p41 = por %p39, %p40
      %p42 = scmp.ne.s32.totalorder %s28, %s29
      %p43 = scmp.eq.s32.totalorder %s21, 1
      %p44 = por %p42, %p43
      %p46 = scmp.ne.s32.totalorder %s29, %s45
      %p47 = scmp.eq.s32.totalorder %s21, 0
      %p48 = por %p46, %p47
      %s50 = sadd.s32 %s49, 1
      %p53 = scmp.eq.s32.totalorder %s15, 1
      %p54 = scmp.ne.s32.totalorder %s49, %s51
      %p55 = scmp.eq.s32.totalorder %s15, 0
      %p56 = por %p54, %p55
      %p57 = scmp.ne.s32.totalorder %s49, %s51
      %p58 = scmp.eq.s32.totalorder %s20, 1
      %p59 = por %p57, %p58
      %p60 = scmp.ne.s32.totalorder %s51, %s52
      %p61 = scmp.eq.s32.totalorder %s20, 0
      %p62 = por %p60, %p61
      %p63 = scmp.ne.s32.totalorder %s51, %s52
      %p64 = scmp.eq.s32.totalorder %s21, 1
      %p65 = por %p63, %p64
      %p67 = scmp.ne.s32.totalorder %s52, %s66
      %p68 = scmp.eq.s32.totalorder %s21, 0
      %p69 = por %p67, %p68
      %s70 = ssub.s32 %s15, %s22
      %p71 = scmp.eq.s32.totalorder %s70, 0
      %s73 = sadd.s32 %s72, 1
      %s74 = scalar_select %p71, %s72, %s73
      %p77 = pneg %p71
      %p78 = scmp.eq.s32.totalorder %s15, 1
      %p79 = por %p77, %p78
      %p80 = scmp.ne.s32.totalorder %s72, %s75
      %p81 = scmp.eq.s32.totalorder %s15, 0
      %p82 = por %p80, %p81
      %p83 = scmp.ne.s32.totalorder %s72, %s75
      %p84 = scmp.eq.s32.totalorder %s20, 1
      %p85 = por %p83, %p84
      %p86 = scmp.ne.s32.totalorder %s75, %s76
      %p87 = scmp.eq.s32.totalorder %s20, 0
      %p88 = por %p86, %p87
      %p89 = scmp.ne.s32.totalorder %s75, %s76
      %p90 = scmp.eq.s32.totalorder %s21, 1
      %p91 = por %p89, %p90
      %p93 = scmp.ne.s32.totalorder %s76, %s92
      %p94 = scmp.eq.s32.totalorder %s21, 0
      %p95 = por %p93, %p94
      %p96 = scmp.le.s32.totalorder 1, %s15
      %p97 = scmp.lt.s32.totalorder %s15, 3
      %p98 = pnand %p96, %p97
      %p99 = pneg %p98
      // Predicated region
      $region9: #{tpu_custom_call.1} parent=5 // pred_check
        _
      $region10: #{tpu_custom_call.1} parent=5 // pred_check_branch
        %101 = sbr.rel (%p98) target = $region12
      $region11: #{tpu_custom_call.1} parent=5 // pred_region
        %s102 = ssub.s32 %s15, 1
        // Predicated region
        $region13: #{tpu_custom_call.1} parent=11 // pred_check
          %p103 = pneg %p62
        $region14: #{tpu_custom_call.1} parent=11 // pred_check_branch
          %105 = sbr.rel (%p103) target = $region16
        $region15: #{tpu_custom_call.1} parent=11 // pred_region
          %s107 = ssub.s32 2560, 2560
          %108 = vsyncadd [#allocation6], %s107
          %s109 = sshll.u32 [#allocation5], 4
          %s110 = int_to_ptr.vmem [resolvable:$true] %s109
          %115 = dma.hbm_to_vmem [thread:$0]  %s1, 2560, %s110, [#allocation6], 128, 128, 8
        $region16: #{tpu_custom_call.1} parent=11 // pred_fallthru
          _
      $region12: #{tpu_custom_call.1} parent=5 // pred_fallthru
        _
      %p116 = scmp.lt.s32.totalorder %s15, 2
      // Predicated region
      $region17: #{tpu_custom_call.1} parent=5 // pred_check
        %p117 = pneg %p116
      $region18: #{tpu_custom_call.1} parent=5 // pred_check_branch
        %119 = sbr.rel (%p117) target = $region20
      $region19: #{tpu_custom_call.1} parent=5 // pred_region
        // Predicated region
        $region21: #{tpu_custom_call.1} parent=19 // pred_check
          %p120 = pneg %p35
        $region22: #{tpu_custom_call.1} parent=19 // pred_check_branch
          %122 = sbr.rel (%p120) target = $region24
        $region23: #{tpu_custom_call.1} parent=19 // pred_region
          %s123 = sand.u32 %s25, 1
          %s124 = scalar_lea.sflag [#allocation3], %s123
          %s125 = sand.u32 %s25, 1
          %s126 = smul.addr %s125, 2
          %s127 = scalar_lea.vmem [#allocation2], %s126
          %s129 = ssub.s32 32, 32
          %130 = vsyncadd %s124, %s129
          %s131 = smul.addr %s15, 32
          %s132 = scalar_lea.hbm %s0, %s131
          %s134 = sshll.u32 %s127, 4
          %s135 = int_to_ptr.vmem [resolvable:$true] %s134
          %137 = dma.hbm_to_vmem [thread:$0]  %s132, 32, %s135, %s124
        $region24: #{tpu_custom_call.1} parent=19 // pred_fallthru
          _
      $region20: #{tpu_custom_call.1} parent=5 // pred_fallthru
        _
      %p138 = scmp.le.s32.totalorder 1, %s15
      %p139 = scmp.lt.s32.totalorder %s15, 3
      %p140 = pnand %p138, %p139
      %p141 = pneg %p140
      // Predicated region
      $region25: #{tpu_custom_call.1} parent=5 // pred_check
        _
      $region26: #{tpu_custom_call.1} parent=5 // pred_check_branch
        %143 = sbr.rel (%p140) target = $region28
      $region27: #{tpu_custom_call.1} parent=5 // pred_region
        %s144 = ssub.s32 %s15, 1
        %s145 = sand.u32 %s28, 1
        %s146 = scalar_lea.sflag [#allocation3], %s145
        %s147 = sand.u32 %s28, 1
        %s148 = smul.addr %s147, 2
        %s149 = scalar_lea.vmem [#allocation2], %s148
        // Predicated region
        $region29: #{tpu_custom_call.1} parent=27 // pred_check
          %p150 = pneg %p41
        $region30: #{tpu_custom_call.1} parent=27 // pred_check_branch
          %152 = sbr.rel (%p150) target = $region32
        $region31: #{tpu_custom_call.1} parent=27 // pred_region
          %153 = dma.done %s146, 32
        $region32: #{tpu_custom_call.1} parent=27 // pred_fallthru
          _
        // Predicated region
        $region33: #{tpu_custom_call.1} parent=27 // pred_check
          %p154 = pneg %p62
        $region34: #{tpu_custom_call.1} parent=27 // pred_check_branch
          %156 = sbr.rel (%p154) target = $region36
        $region35: #{tpu_custom_call.1} parent=27 // pred_region
          %157 = dma.done [#allocation6], 2560
        $region36: #{tpu_custom_call.1} parent=27 // pred_fallthru
          _
        %s158 = sand.u32 %s28, 1
        %s159 = scalar_lea.sflag [#allocation3], %s158
        %s160 = sand.u32 %s28, 1
        %s161 = smul.addr %s160, 2
        %s162 = scalar_lea.vmem [#allocation2], %s161
        %p163 = pneg %p41
        %p164 = pneg %p38
        %p165 = pneg %p62
        %p166 = pneg %p59
        %p167 = pneg %p88
        %p168 = pneg %p85
        %s169 = sand.u32 %s75, 1
        %s170 = scalar_lea.sflag [#allocation4], %s169
        %s171 = sand.u32 %s75, 1
        %s172 = scalar_lea.vmem [#allocation7], %s171
        %v173 = vld [vmem:[%s149] sm:$0x3]
        %v174 = vld [vmem:[#allocation5] sm:$0xff]
        %v175 = vld [vmem:[#allocation5 + $0x8] sm:$0xff]
        %v176 = vld [vmem:[#allocation5 + $0x10] sm:$0xff]
        %v177 = vld [vmem:[#allocation5 + $0x18] sm:$0xff]
        %v178 = vld [vmem:[#allocation5 + $0x20] sm:$0xff]
        %v179 = vld [vmem:[#allocation5 + $0x28] sm:$0xff]
        %v180 = vld [vmem:[#allocation5 + $0x30] sm:$0xff]
        %v181 = vld [vmem:[#allocation5 + $0x38] sm:$0xff]
        %v182 = vld [vmem:[#allocation5 + $0x40] sm:$0xff]
        %v183 = vld [vmem:[#allocation5 + $0x48] sm:$0xff]
        %v184 = vld [vmem:[#allocation5 + $0x50] sm:$0xff]
        %v185 = vld [vmem:[#allocation5 + $0x58] sm:$0xff]
        %v186 = vld [vmem:[#allocation5 + $0x60] sm:$0xff]
        %v187 = vld [vmem:[#allocation5 + $0x68] sm:$0xff]
        %v188 = vld [vmem:[#allocation5 + $0x70] sm:$0xff]
        %v189 = vld [vmem:[#allocation5 + $0x78] sm:$0xff]
        %v190 = vld [vmem:[#allocation5 + $0x80] sm:$0xff]
        %v191 = vld [vmem:[#allocation5 + $0x88] sm:$0xff]
        %v192 = vld [vmem:[#allocation5 + $0x90] sm:$0xff]
        %v193 = vld [vmem:[#allocation5 + $0x98] sm:$0xff]
        %195 = vset.pattern.permute.xlu0 0
        %196 = vperm.xlu0 %195, %v174
        %v197 = vpop.permute.xlu0 %196
        %200 = vset.pattern.permute.xlu0 0
        %201 = vperm.xlu0 %200, %v175
        %v202 = vpop.permute.xlu0 %201
        %205 = vset.pattern.permute.xlu0 0
        %206 = vperm.xlu0 %205, %v176
        %v207 = vpop.permute.xlu0 %206
        %210 = vset.pattern.permute.xlu0 0
        %211 = vperm.xlu0 %210, %v177
        %v212 = vpop.permute.xlu0 %211
        %v214 = vlaneseq
        %v215 = vshrl.u32 %v214, 7
        %v216 = vsub.s32 0, %v215
        %v217 = vrot.slane %v173, %v216
        %v218 = vmul.f32 %v197, %v217
        %v219 = vmul.f32 %v202, %v217
        %v220 = vmul.f32 %v207, %v217
        %v221 = vmul.f32 %v212, %v217
        %222 = vset.pattern.permute.xlu0 1
        %223 = vperm.xlu0 %222, %v174
        %v224 = vpop.permute.xlu0 %223
        %226 = vset.pattern.permute.xlu0 1
        %227 = vperm.xlu0 %226, %v175
        %v228 = vpop.permute.xlu0 %227
        %230 = vset.pattern.permute.xlu0 1
        %231 = vperm.xlu0 %230, %v176
        %v232 = vpop.permute.xlu0 %231
        %234 = vset.pattern.permute.xlu0 1
        %235 = vperm.xlu0 %234, %v177
        %v236 = vpop.permute.xlu0 %235
        %v238 = vlaneseq
        %v239 = vshrl.u32 %v238, 7
        %v240 = vsub.s32 1, %v239
        %v241 = vrot.slane %v173, %v240
        %v242 = vmul.f32 %v224, %v241
        %v243 = vmul.f32 %v228, %v241
        %v244 = vmul.f32 %v232, %v241
        %v245 = vmul.f32 %v236, %v241
        %v246 = vadd.f32 %v218, %v242
        %v247 = vadd.f32 %v219, %v243
        %v248 = vadd.f32 %v220, %v244
        %v249 = vadd.f32 %v221, %v245
        %250 = vset.pattern.permute.xlu0 32
        %251 = vperm.xlu0 %250, %v174
        %v252 = vpop.permute.xlu0 %251
        %254 = vset.pattern.permute.xlu0 32
        %255 = vperm.xlu0 %254, %v175
        %v256 = vpop.permute.xlu0 %255
        %258 = vset.pattern.permute.xlu0 32
        %259 = vperm.xlu0 %258, %v176
        %v260 = vpop.permute.xlu0 %259
        %262 = vset.pattern.permute.xlu0 32
        %263 = vperm.xlu0 %262, %v177
        %v264 = vpop.permute.xlu0 %263
        %v266 = vadd.f32 %v246, %v252
        %v267 = vadd.f32 %v247, %v256
        %v268 = vadd.f32 %v248, %v260
        %v269 = vadd.f32 %v249, %v264
        %v270 = vtanh.pop %v266
        %v271 = vtanh.pop %v267
        %v272 = vtanh.pop %v268
        %v273 = vtanh.pop %v269
        %275 = vset.pattern.permute.xlu0 32
        %276 = vperm.xlu0 %275, %v178
        %v277 = vpop.permute.xlu0 %276
        %280 = vset.pattern.permute.xlu0 32
        %281 = vperm.xlu0 %280, %v179
        %v282 = vpop.permute.xlu0 %281
        %285 = vset.pattern.permute.xlu0 32
        %286 = vperm.xlu0 %285, %v180
        %v287 = vpop.permute.xlu0 %286
        %290 = vset.pattern.permute.xlu0 32
        %291 = vperm.xlu0 %290, %v181
        %v292 = vpop.permute.xlu0 %291
        %vm294 = vcmask 261120
        %v295 = vsel %vm294, %v178, 0
        %v297 = vsel %vm294, %v179, 0
        %v299 = vsel %vm294, %v180, 0
        %v301 = vsel %vm294, %v181, 0
        %303 = vmatprep.subr.mxu0 0.0
        %304 = vmatpush1.msra.mxu0 %v270
        %305 = vmatprep.subr.mxu0 0.0
        %306 = vmatpush1.msra.mxu0 %v271
        %307 = vmatprep.subr.mxu0 0.0
        %308 = vmatpush1.msra.mxu0 %v272
        %309 = vmatprep.subr.mxu0 0.0
        %310 = vmatpush1.msra.mxu0 %v273
        %311 = vmatprep.subr.mxu0 0.0
        %312 = vmatpush1.msra.mxu0 0.0
        %313 = vmatprep.subr.mxu0 0.0
        %314 = vmatpush1.msra.mxu0 0.0
        %315 = vmatprep.subr.mxu0 0.0
        %316 = vmatpush1.msra.mxu0 0.0
        %317 = vmatprep.subr.mxu0 0.0
        %318 = vmatpush1.msra.mxu0 0.0
        %319 = vmatprep.subr.mxu0 0.0
        %320 = vmatpush1.msra.mxu0 0.0
        %321 = vmatprep.subr.mxu0 0.0
        %322 = vmatpush1.msra.mxu0 0.0
        %323 = vmatprep.subr.mxu0 0.0
        %324 = vmatpush1.msra.mxu0 0.0
        %325 = vmatprep.subr.mxu0 0.0
        %326 = vmatpush1.msra.mxu0 0.0
        %327 = vmatprep.subr.mxu0 0.0
        %328 = vmatpush1.msra.mxu0 0.0
        %329 = vmatprep.subr.mxu0 0.0
        %330 = vmatpush1.msra.mxu0 0.0
        %331 = vmatprep.subr.mxu0 0.0
        %332 = vmatpush1.msra.mxu0 0.0
        %333 = vmatprep.subr.mxu0 0.0
        %334 = vmatpush1.msra.mxu0 0.0
        %335 = vmatprep.subr.mxu0 0.0
        %336 = vmatpush1.msra.mxu0 0.0
        %337 = vmatprep.subr.mxu0 0.0
        %338 = vmatpush1.msra.mxu0 0.0
        %339 = vmatprep.subr.mxu0 0.0
        %340 = vmatpush1.msra.mxu0 0.0
        %341 = vmatprep.subr.mxu0 0.0
        %342 = vmatpush1.msra.mxu0 0.0
        %343 = vmatprep.subr.mxu0 0.0
        %344 = vmatpush1.msra.mxu0 0.0
        %345 = vmatprep.subr.mxu0 0.0
        %346 = vmatpush1.msra.mxu0 0.0
        %347 = vmatprep.subr.mxu0 0.0
        %348 = vmatpush1.msra.mxu0 0.0
        %349 = vmatprep.subr.mxu0 0.0
        %350 = vmatpush1.msra.mxu0 0.0
        %351 = vmatprep.subr.mxu0 0.0
        %352 = vmatpush1.msra.mxu0 0.0
        %353 = vmatprep.subr.mxu0 0.0
        %354 = vmatpush1.msra.mxu0 0.0
        %355 = vmatprep.subr.mxu0 0.0
        %356 = vmatpush1.msra.mxu0 0.0
        %357 = vmatprep.subr.mxu0 0.0
        %358 = vmatpush1.msra.mxu0 0.0
        %359 = vmatprep.subr.mxu0 0.0
        %360 = vmatpush1.msra.mxu0 0.0
        %361 = vmatprep.subr.mxu0 0.0
        %362 = vmatpush1.msra.mxu0 0.0
        %363 = vmatprep.subr.mxu0 0.0
        %364 = vmatpush1.msra.mxu0 0.0
        %365 = vmatprep.subr.mxu0 0.0
        %366 = vmatpush1.msra.mxu0 0.0
        %367 = vmatprep.mubr.f32.mxu0 0.0
        %368 = vmatmul.mubr.f32.gmra.mrb[0].mxu0 %v295
        %v369 = vpop.f32.mrb[0].mxu0
        %v370 = vadd.f32 %v277, %v369
        %v371 = vpop.f32.mrb[0].mxu0
        %372 = vmatprep.mubr.f32.mxu0 0.0
        %373 = vmatmul.mubr.f32.gmra.mrb[0].mxu0 %v297
        %v374 = vpop.f32.mrb[0].mxu0
        %v375 = vadd.f32 %v282, %v374
        %v376 = vpop.f32.mrb[0].mxu0
        %377 = vmatprep.mubr.f32.mxu0 0.0
        %378 = vmatmul.mubr.f32.gmra.mrb[0].mxu0 %v299
        %v379 = vpop.f32.mrb[0].mxu0
        %v380 = vadd.f32 %v287, %v379
        %v381 = vpop.f32.mrb[0].mxu0
        %382 = vmatprep.mubr.f32.mxu0 0.0
        %383 = vmatmul.mubr.f32.gmra.mrb[0].mxu0 %v301
        %v384 = vpop.f32.mrb[0].mxu0
        %v385 = vadd.f32 %v292, %v384
        %v386 = vpop.f32.mrb[0].mxu0
        %387 = vdwg.mxu0
        %v388 = vtanh.pop %v370
        %v389 = vtanh.pop %v375
        %v390 = vtanh.pop %v380
        %v391 = vtanh.pop %v385
        %393 = vset.pattern.permute.xlu0 32
        %394 = vperm.xlu0 %393, %v182
        %v395 = vpop.permute.xlu0 %394
        %398 = vset.pattern.permute.xlu0 32
        %399 = vperm.xlu0 %398, %v183
        %v400 = vpop.permute.xlu0 %399
        %403 = vset.pattern.permute.xlu0 32
        %404 = vperm.xlu0 %403, %v184
        %v405 = vpop.permute.xlu0 %404
        %408 = vset.pattern.permute.xlu0 32
        %409 = vperm.xlu0 %408, %v185
        %v410 = vpop.permute.xlu0 %409
        %v412 = vsel %vm294, %v182, 0
        %v414 = vsel %vm294, %v183, 0
        %v416 = vsel %vm294, %v184, 0
        %v418 = vsel %vm294, %v185, 0
        %420 = vmatprep.subr.mxu0 0.0
        %421 = vmatpush1.msra.mxu0 %v388
        %422 = vmatprep.subr.mxu0 0.0
        %423 = vmatpush1.msra.mxu0 %v389
        %424 = vmatprep.subr.mxu0 0.0
        %425 = vmatpush1.msra.mxu0 %v390
        %426 = vmatprep.subr.mxu0 0.0
        %427 = vmatpush1.msra.mxu0 %v391
        %428 = vmatprep.subr.mxu0 0.0
        %429 = vmatpush1.msra.mxu0 0.0
        %430 = vmatprep.subr.mxu0 0.0
        %431 = vmatpush1.msra.mxu0 0.0
        %432 = vmatprep.subr.mxu0 0.0
        %433 = vmatpush1.msra.mxu0 0.0
        %434 = vmatprep.subr.mxu0 0.0
        %435 = vmatpush1.msra.mxu0 0.0
        %436 = vmatprep.subr.mxu0 0.0
        %437 = vmatpush1.msra.mxu0 0.0
        %438 = vmatprep.subr.mxu0 0.0
        %439 = vmatpush1.msra.mxu0 0.0
        %440 = vmatprep.subr.mxu0 0.0
        %441 = vmatpush1.msra.mxu0 0.0
        %442 = vmatprep.subr.mxu0 0.0
        %443 = vmatpush1.msra.mxu0 0.0
        %444 = vmatprep.subr.mxu0 0.0
        %445 = vmatpush1.msra.mxu0 0.0
        %446 = vmatprep.subr.mxu0 0.0
        %447 = vmatpush1.msra.mxu0 0.0
        %448 = vmatprep.subr.mxu0 0.0
        %449 = vmatpush1.msra.mxu0 0.0
        %450 = vmatprep.subr.mxu0 0.0
        %451 = vmatpush1.msra.mxu0 0.0
        %452 = vmatprep.subr.mxu0 0.0
        %453 = vmatpush1.msra.mxu0 0.0
        %454 = vmatprep.subr.mxu0 0.0
        %455 = vmatpush1.msra.mxu0 0.0
        %456 = vmatprep.subr.mxu0 0.0
        %457 = vmatpush1.msra.mxu0 0.0
        %458 = vmatprep.subr.mxu0 0.0
        %459 = vmatpush1.msra.mxu0 0.0
        %460 = vmatprep.subr.mxu0 0.0
        %461 = vmatpush1.msra.mxu0 0.0
        %462 = vmatprep.subr.mxu0 0.0
        %463 = vmatpush1.msra.mxu0 0.0
        %464 = vmatprep.subr.mxu0 0.0
        %465 = vmatpush1.msra.mxu0 0.0
        %466 = vmatprep.subr.mxu0 0.0
        %467 = vmatpush1.msra.mxu0 0.0
        %468 = vmatprep.subr.mxu0 0.0
        %469 = vmatpush1.msra.mxu0 0.0
        %470 = vmatprep.subr.mxu0 0.0
        %471 = vmatpush1.msra.mxu0 0.0
        %472 = vmatprep.subr.mxu0 0.0
        %473 = vmatpush1.msra.mxu0 0.0
        %474 = vmatprep.subr.mxu0 0.0
        %475 = vmatpush1.msra.mxu0 0.0
        %476 = vmatprep.subr.mxu0 0.0
        %477 = vmatpush1.msra.mxu0 0.0
        %478 = vmatprep.subr.mxu0 0.0
        %479 = vmatpush1.msra.mxu0 0.0
        %480 = vmatprep.subr.mxu0 0.0
        %481 = vmatpush1.msra.mxu0 0.0
        %482 = vmatprep.subr.mxu0 0.0
        %483 = vmatpush1.msra.mxu0 0.0
        %484 = vmatprep.mubr.f32.mxu0 0.0
        %485 = vmatmul.mubr.f32.gmra.mrb[0].mxu0 %v412
        %v486 = vpop.f32.mrb[0].mxu0
        %v487 = vadd.f32 %v395, %v486
        %v488 = vpop.f32.mrb[0].mxu0
        %489 = vmatprep.mubr.f32.mxu0 0.0
        %490 = vmatmul.mubr.f32.gmra.mrb[0].mxu0 %v414
        %v491 = vpop.f32.mrb[0].mxu0
        %v492 = vadd.f32 %v400, %v491
        %v493 = vpop.f32.mrb[0].mxu0
        %494 = vmatprep.mubr.f32.mxu0 0.0
        %495 = vmatmul.mubr.f32.gmra.mrb[0].mxu0 %v416
        %v496 = vpop.f32.mrb[0].mxu0
        %v497 = vadd.f32 %v405, %v496
        %v498 = vpop.f32.mrb[0].mxu0
        %499 = vmatprep.mubr.f32.mxu0 0.0
        %500 = vmatmul.mubr.f32.gmra.mrb[0].mxu0 %v418
        %v501 = vpop.f32.mrb[0].mxu0
        %v502 = vadd.f32 %v410, %v501
        %v503 = vpop.f32.mrb[0].mxu0
        %504 = vdwg.mxu0
        %v505 = vtanh.pop %v487
        %v506 = vtanh.pop %v492
        %v507 = vtanh.pop %v497
        %v508 = vtanh.pop %v502
        %510 = vset.pattern.permute.xlu0 32
        %511 = vperm.xlu0 %510, %v186
        %v512 = vpop.permute.xlu0 %511
        %515 = vset.pattern.permute.xlu0 32
        %516 = vperm.xlu0 %515, %v187
        %v517 = vpop.permute.xlu0 %516
        %520 = vset.pattern.permute.xlu0 32
        %521 = vperm.xlu0 %520, %v188
        %v522 = vpop.permute.xlu0 %521
        %525 = vset.pattern.permute.xlu0 32
        %526 = vperm.xlu0 %525, %v189
        %v527 = vpop.permute.xlu0 %526
        %v529 = vsel %vm294, %v186, 0
        %v531 = vsel %vm294, %v187, 0
        %v533 = vsel %vm294, %v188, 0
        %v535 = vsel %vm294, %v189, 0
        %537 = vmatprep.subr.mxu0 0.0
        %538 = vmatpush1.msra.mxu0 %v505
        %539 = vmatprep.subr.mxu0 0.0
        %540 = vmatpush1.msra.mxu0 %v506
        %541 = vmatprep.subr.mxu0 0.0
        %542 = vmatpush1.msra.mxu0 %v507
        %543 = vmatprep.subr.mxu0 0.0
        %544 = vmatpush1.msra.mxu0 %v508
        %545 = vmatprep.subr.mxu0 0.0
        %546 = vmatpush1.msra.mxu0 0.0
        %547 = vmatprep.subr.mxu0 0.0
        %548 = vmatpush1.msra.mxu0 0.0
        %549 = vmatprep.subr.mxu0 0.0
        %550 = vmatpush1.msra.mxu0 0.0
        %551 = vmatprep.subr.mxu0 0.0
        %552 = vmatpush1.msra.mxu0 0.0
        %553 = vmatprep.subr.mxu0 0.0
        %554 = vmatpush1.msra.mxu0 0.0
        %555 = vmatprep.subr.mxu0 0.0
        %556 = vmatpush1.msra.mxu0 0.0
        %557 = vmatprep.subr.mxu0 0.0
        %558 = vmatpush1.msra.mxu0 0.0
        %559 = vmatprep.subr.mxu0 0.0
        %560 = vmatpush1.msra.mxu0 0.0
        %561 = vmatprep.subr.mxu0 0.0
        %562 = vmatpush1.msra.mxu0 0.0
        %563 = vmatprep.subr.mxu0 0.0
        %564 = vmatpush1.msra.mxu0 0.0
        %565 = vmatprep.subr.mxu0 0.0
        %566 = vmatpush1.msra.mxu0 0.0
        %567 = vmatprep.subr.mxu0 0.0
        %568 = vmatpush1.msra.mxu0 0.0
        %569 = vmatprep.subr.mxu0 0.0
        %570 = vmatpush1.msra.mxu0 0.0
        %571 = vmatprep.subr.mxu0 0.0
        %572 = vmatpush1.msra.mxu0 0.0
        %573 = vmatprep.subr.mxu0 0.0
        %574 = vmatpush1.msra.mxu0 0.0
        %575 = vmatprep.subr.mxu0 0.0
        %576 = vmatpush1.msra.mxu0 0.0
        %577 = vmatprep.subr.mxu0 0.0
        %578 = vmatpush1.msra.mxu0 0.0
        %579 = vmatprep.subr.mxu0 0.0
        %580 = vmatpush1.msra.mxu0 0.0
        %581 = vmatprep.subr.mxu0 0.0
        %582 = vmatpush1.msra.mxu0 0.0
        %583 = vmatprep.subr.mxu0 0.0
        %584 = vmatpush1.msra.mxu0 0.0
        %585 = vmatprep.subr.mxu0 0.0
        %586 = vmatpush1.msra.mxu0 0.0
        %587 = vmatprep.subr.mxu0 0.0
        %588 = vmatpush1.msra.mxu0 0.0
        %589 = vmatprep.subr.mxu0 0.0
        %590 = vmatpush1.msra.mxu0 0.0
        %591 = vmatprep.subr.mxu0 0.0
        %592 = vmatpush1.msra.mxu0 0.0
        %593 = vmatprep.subr.mxu0 0.0
        %594 = vmatpush1.msra.mxu0 0.0
        %595 = vmatprep.subr.mxu0 0.0
        %596 = vmatpush1.msra.mxu0 0.0
        %597 = vmatprep.subr.mxu0 0.0
        %598 = vmatpush1.msra.mxu0 0.0
        %599 = vmatprep.subr.mxu0 0.0
        %600 = vmatpush1.msra.mxu0 0.0
        %601 = vmatprep.mubr.f32.mxu0 0.0
        %602 = vmatmul.mubr.f32.gmra.mrb[0].mxu0 %v529
        %v603 = vpop.f32.mrb[0].mxu0
        %v604 = vadd.f32 %v512, %v603
        %v605 = vpop.f32.mrb[0].mxu0
        %606 = vmatprep.mubr.f32.mxu0 0.0
        %607 = vmatmul.mubr.f32.gmra.mrb[0].mxu0 %v531
        %v608 = vpop.f32.mrb[0].mxu0
        %v609 = vadd.f32 %v517, %v608
        %v610 = vpop.f32.mrb[0].mxu0
        %611 = vmatprep.mubr.f32.mxu0 0.0
        %612 = vmatmul.mubr.f32.gmra.mrb[0].mxu0 %v533
        %v613 = vpop.f32.mrb[0].mxu0
        %v614 = vadd.f32 %v522, %v613
        %v615 = vpop.f32.mrb[0].mxu0
        %616 = vmatprep.mubr.f32.mxu0 0.0
        %617 = vmatmul.mubr.f32.gmra.mrb[0].mxu0 %v535
        %v618 = vpop.f32.mrb[0].mxu0
        %v619 = vadd.f32 %v527, %v618
        %v620 = vpop.f32.mrb[0].mxu0
        %621 = vdwg.mxu0
        %v622 = vtanh.pop %v604
        %v623 = vtanh.pop %v609
        %v624 = vtanh.pop %v614
        %v625 = vtanh.pop %v619
        %627 = vset.pattern.permute.xlu0 0
        %628 = vperm.xlu0 %627, %v190
        %v629 = vpop.permute.xlu0 %628
        %632 = vset.pattern.permute.xlu0 0
        %633 = vperm.xlu0 %632, %v191
        %v634 = vpop.permute.xlu0 %633
        %637 = vset.pattern.permute.xlu0 0
        %638 = vperm.xlu0 %637, %v192
        %v639 = vpop.permute.xlu0 %638
        %642 = vset.pattern.permute.xlu0 0
        %643 = vperm.xlu0 %642, %v193
        %v644 = vpop.permute.xlu0 %643
        %v646 = vmul.f32 %v629, %v622
        %v647 = vmul.f32 %v634, %v623
        %v648 = vmul.f32 %v639, %v624
        %v649 = vmul.f32 %v644, %v625
        %v650 = vadd.f32 %v646, %v647
        %v651 = vadd.f32 %v650, %v648
        %v652 = vadd.f32 %v651, %v649
        %v653 = vrot.slane %v652, 4
        %v654 = vadd.f32 %v652, %v653
        %v655 = vrot.slane %v654, 2
        %v656 = vadd.f32 %v654, %v655
        %v657 = vrot.slane %v656, 1
        %v658 = vadd.f32 %v656, %v657
        %659 = vset.pattern.permute.xlu0 32
        %660 = vperm.xlu0 %659, %v190
        %v661 = vpop.permute.xlu0 %660
        %v663 = vadd.f32 %v658, %v661
        %664 = vst [vmem:[%s172] sm:$0x1] %v663
        %s665 = sand.u32 %s75, 1
        %s666 = scalar_lea.sflag [#allocation4], %s665
        %s667 = sand.u32 %s75, 1
        %s668 = scalar_lea.vmem [#allocation7], %s667
        // Predicated region
        $region37: #{tpu_custom_call.1} parent=27 // pred_check
          %p669 = pneg %p85
        $region38: #{tpu_custom_call.1} parent=27 // pred_check_branch
          %671 = sbr.rel (%p669) target = $region40
        $region39: #{tpu_custom_call.1} parent=27 // pred_region
          %s673 = ssub.s32 16, 16
          %674 = vsyncadd %s666, %s673
          %s675 = smul.addr %s20, 16
          %s676 = scalar_lea.hbm %s2, %s675
          %s678 = sshll.u32 %s668, 4
          %s679 = int_to_ptr.vmem [resolvable:$true] %s678
          %681 = dma.vmem_to_hbm [thread:$0]  %s679, 16, %s676, %s666
        $region40: #{tpu_custom_call.1} parent=27 // pred_fallthru
          _
      $region28: #{tpu_custom_call.1} parent=5 // pred_fallthru
        _
      %p682 = scmp.le.s32.totalorder 2, %s15
      // Predicated region
      $region41: #{tpu_custom_call.1} parent=5 // pred_check
        %p683 = pneg %p682
      $region42: #{tpu_custom_call.1} parent=5 // pred_check_branch
        %685 = sbr.rel (%p683) target = $region44
      $region43: #{tpu_custom_call.1} parent=5 // pred_region
        %s686 = ssub.s32 %s15, 2
        // Predicated region
        $region45: #{tpu_custom_call.1} parent=43 // pred_check
          %p687 = pneg %p91
        $region46: #{tpu_custom_call.1} parent=43 // pred_check_branch
          %689 = sbr.rel (%p687) target = $region48
        $region47: #{tpu_custom_call.1} parent=43 // pred_region
          %s690 = sand.u32 %s76, 1
          %s691 = scalar_lea.sflag [#allocation4], %s690
          %s692 = sand.u32 %s76, 1
          %s693 = scalar_lea.vmem [#allocation7], %s692
          %694 = dma.done %s691, 16
        $region48: #{tpu_custom_call.1} parent=43 // pred_fallthru
          _
      $region44: #{tpu_custom_call.1} parent=5 // pred_fallthru
        _
    $region6: #{tpu_custom_call.1} parent=1 // loop_footer
      %s19 = sadd.s32 1, %s15
    $region7: #{tpu_custom_call.1} parent=1 // loop_footer_branch
      %14 = sbr.rel target = $region3
    $region8: #{tpu_custom_call.1} parent=1 // loop_exit
      _
    %695 = vsyncpa [#allocation3], 1
    %s696 = scalar_lea.sflag [#allocation3], 1
    %697 = vsyncpa %s696, 1
    %698 = vsyncpa [#allocation6], 1
    %699 = vsyncpa [#allocation4], 1
    %s700 = scalar_lea.sflag [#allocation4], 1
    %701 = vsyncpa %s700, 1

</llo_original>
